<compile_context>
chip_gen: v6e
topology: v6e:2x2x1
jax: 0.10.0
libtpu: 0.0.40
codegen_flags: <defaults>
</compile_context>

<pallas_src>
import functools
import math

import jax
import jax.numpy as jnp
from jax.experimental import pallas as pl
from jax.experimental.pallas import tpu as pltpu

N_HIDDEN = 32      # n_hidden (small-shape version of the default 64)
N_LAYERS = 4       # n_layers
N_OUT = 6          # re/im parts of c0, c1, c2
N_OUT_PAD = 8      # 6 output rows padded to a full 8-sublane tile
LANE = 128         # TPU lane width


def _round_up(x, m):
    return ((x + m - 1) // m) * m


def _default_act_dtype():
    """bf16 tanh on generations with a bf16 VPU/EUP (v6e/v7x+); f32 otherwise."""
    try:
        kind = jax.devices()[0].device_kind.lower()
    except Exception:
        return jnp.float32
    if any(v in kind for v in ("v2", "v3", "v4", "v5")):
        return jnp.float32
    return jnp.bfloat16 if ("tpu" in kind or "v6" in kind or "v7" in kind) else jnp.float32


def _mlp_kernel(t_ref, w_in_ref, b_in_ref, w_hid_ref, b_hid_ref,
                w_out_ref, b_out_ref, o_ref, *, act_dtype):
    # Input layer: (H,1) * (1,tb) + (H,1) -> (H,tb).  Pure VPU broadcast
    # (K=1, so no degenerate MXU contraction).  t is exact f32; tanh runs in
    # act_dtype (bf16 on v6e/v7x where the EUP is bf16-native, f32 on v5e).
    t = t_ref[...]                                          # (1, tb) f32
    x = jnp.tanh((w_in_ref[...] * t + b_in_ref[...]).astype(act_dtype))

    # Hidden layers (static unroll): bf16 operands on the MXU, f32 accumulate,
    # f32 bias add, tanh in act_dtype.  W_hid is already bf16 (cast once in the
    # wrapper, stays resident in VMEM).
    for l in range(N_LAYERS - 1):
        acc = jnp.dot(w_hid_ref[l], x.astype(jnp.bfloat16),
                      preferred_element_type=jnp.float32)   # (H, tb) f32
        x = jnp.tanh((acc + b_hid_ref[l]).astype(act_dtype))

    # Output layer: (8,H) @ (H,tb) + (8,1) -> (8,tb).  Rows 6..7 are zero
    # padding, so the store fills all 8 sublanes and 128 lanes (dense vst).
    out = jnp.dot(w_out_ref[...], x.astype(jnp.bfloat16),
                  preferred_element_type=jnp.float32) + b_out_ref[...]
    o_ref[...] = out.astype(o_ref.dtype)


def wavefunction_nn_forward(t, params, *, batch_tile=2048, act_dtype=None,
                            lane_major_output=False):
    """t: (B, 1) float32 (PyTorch layout).

    Returns (B, 6) float32, or (6, B) when lane_major_output=True (skips the
    wrapper-side transpose for consumers that accept a lane-major layout).
    """
    (w_in, b_in, w_hid, b_hid, w_out, b_out) = params
    if act_dtype is None:
        act_dtype = _default_act_dtype()
    B = t.shape[0]

    # --- Batch tiling: batch lives on the lane axis (multiples of 128). ---
    Bp_min = _round_up(B, LANE)
    tb = _round_up(max(LANE, min(int(batch_tile), Bp_min)), LANE)
    if Bp_min >= 2 * LANE:
        # Cap the tile at half the padded batch so the "parallel" batch axis
        # has >= 2 grid steps to shard across v7x's two TensorCores.
        tb = min(tb, max(LANE, _round_up(Bp_min // 2, LANE)))
    Bp = _round_up(Bp_min, tb)
    grid = (Bp // tb,)

    # (B, 1) -> (1, Bp) lane-major, zero-padded batch tail.
    t_lanes = jnp.pad(t.reshape(1, B).astype(jnp.float32), ((0, 0), (0, Bp - B)))

    # MXU operands in bf16 (cast once here, resident in VMEM); biases stay f32.
    w_hid_b = w_hid.astype(jnp.bfloat16)                        # (L-1, H, H)
    # Pad the output layer 6 -> 8 rows (zero rows) for a sublane-dense store.
    w_out_b = jnp.pad(w_out, ((0, N_OUT_PAD - N_OUT), (0, 0))).astype(jnp.bfloat16)
    b_out_p = jnp.pad(b_out, ((0, N_OUT_PAD - N_OUT), (0, 0)))  # (8, 1) f32

    def full(arr):
        # Whole array as one block; constant index map -> VMEM-resident.
        return pl.BlockSpec(arr.shape, lambda i, _n=arr.ndim: (0,) * _n)

    kernel = functools.partial(_mlp_kernel, act_dtype=act_dtype)

    out_t = pl.pallas_call(
        kernel,
        out_shape=jax.ShapeDtypeStruct((N_OUT_PAD, Bp), jnp.float32),
        grid_spec=pltpu.PrefetchScalarGridSpec(
            num_scalar_prefetch=0,
            grid=grid,
            in_specs=[
                pl.BlockSpec((1, tb), lambda i: (0, i)),   # t       (1, Bp)  f32
                full(w_in),                                # W_in    (H, 1)   f32
                full(b_in),                                # b_in    (H, 1)   f32
                full(w_hid_b),                             # W_hid   (L-1,H,H) bf16
                full(b_hid),                               # b_hid   (L-1,H,1) f32
                full(w_out_b),                             # W_out   (8, H)   bf16
                full(b_out_p),                             # b_out   (8, 1)   f32
            ],
            out_specs=pl.BlockSpec((N_OUT_PAD, tb), lambda i: (0, i)),
        ),
        compiler_params=pltpu.CompilerParams(
            dimension_semantics=("parallel",)),   # batch axis shards across TCs
    )(t_lanes, w_in, b_in, w_hid_b, b_hid, w_out_b, b_out_p)

    if lane_major_output:
        return out_t[:N_OUT, :B]        # (6, B): skips the transpose round trip
    return out_t[:N_OUT, :B].T          # (B, 6): PyTorch layout


def init_params(key, n_hidden=N_HIDDEN, n_layers=N_LAYERS, n_out=N_OUT):
    """Deterministic init mimicking PyTorch nn.Linear default (uniform +/- 1/sqrt(fan_in)).
    Weights are stored (out, in) so the kernel computes y = W @ x (batch on lanes)."""
    def linear(k, fan_in, fan_out):
        kw, kb = jax.random.split(k)
        bound = 1.0 / math.sqrt(fan_in)
        w = jax.random.uniform(kw, (fan_out, fan_in), jnp.float32, -bound, bound)
        b = jax.random.uniform(kb, (fan_out, 1), jnp.float32, -bound, bound)
        return w, b

    keys = jax.random.split(key, n_layers + 1)
    w_in, b_in = linear(keys[0], 1, n_hidden)               # (H, 1), (H, 1)
    w_hs, b_hs = [], []
    for l in range(n_layers - 1):
        w, b = linear(keys[1 + l], n_hidden, n_hidden)
        w_hs.append(w)
        b_hs.append(b)
    w_hid = jnp.stack(w_hs, axis=0)                         # (L-1, H, H)
    b_hid = jnp.stack(b_hs, axis=0)                         # (L-1, H, 1)
    w_out, b_out = linear(keys[n_layers], n_hidden, n_out)  # (6, H), (6, 1)
    return (w_in, b_in, w_hid, b_hid, w_out, b_out)


def reference_forward(t, params):
    """Pure-JAX f32 reference in the PyTorch (B, features) layout."""
    (w_in, b_in, w_hid, b_hid, w_out, b_out) = params
    x = jnp.tanh(t @ w_in.T + b_in.T)                       # (B, H)
    for l in range(N_LAYERS - 1):
        x = jnp.tanh(x @ w_hid[l].T + b_hid[l].T)
    return x @ w_out.T + b_out.T                            # (B, 6)


if __name__ == "__main__":
    key = jax.random.PRNGKey(0)
    kp, kt = jax.random.split(key)
    params = init_params(kp)

    act_dtype = _default_act_dtype()
    # bf16 MXU operands everywhere (+ bf16 tanh on v6e/v7x) -> compare against
    # the pure-f32 reference with a correspondingly loosened tolerance.
    tol = 1e-1 if act_dtype == jnp.bfloat16 else 5e-2

    # Primary check: small batch (single grid step).
    B = 8
    t = jax.random.uniform(kt, (B, 1), jnp.float32, 0.0, 1.0)   # time instances
    out = jax.block_until_ready(wavefunction_nn_forward(t, params))
    ref = reference_forward(t, params)
    assert out.shape == (B, N_OUT)
    err = float(jnp.max(jnp.abs(out - ref)))
    assert err < tol, f"mismatch vs pure-JAX reference: {err}"

    # Secondary check: batch large enough to exercise the multi-step
    # (>= 2 grid steps, padded tail) tiling path.
    B2 = 384
    t2 = jax.random.uniform(kt, (B2, 1), jnp.float32, 0.0, 1.0)
    out2 = jax.block_until_ready(wavefunction_nn_forward(t2, params))
    ref2 = reference_forward(t2, params)
    assert out2.shape == (B2, N_OUT)
    err2 = float(jnp.max(jnp.abs(out2 - ref2)))
    assert err2 < tol, f"tiled-path mismatch vs pure-JAX reference: {err2}"

    print("KERNEL_OK")
</pallas_src>

<mosaic_0001>
module attributes {stable_mosaic.version = 11 : i64} {
  func.func @_mlp_kernel(%arg0: i32, %arg1: memref<1x128xf32, #tpu.memory_space<vmem>>, %arg2: memref<32x1xf32, #tpu.memory_space<vmem>>, %arg3: memref<32x1xf32, #tpu.memory_space<vmem>>, %arg4: memref<3x32x32xbf16, #tpu.memory_space<vmem>>, %arg5: memref<3x32x1xf32, #tpu.memory_space<vmem>>, %arg6: memref<8x32xbf16, #tpu.memory_space<vmem>>, %arg7: memref<8x1xf32, #tpu.memory_space<vmem>>, %arg8: memref<8x128xf32, #tpu.memory_space<vmem>>) attributes {dimension_semantics = [#tpu.dimension_semantics<parallel>], iteration_bounds = array<i64: 1>, scalar_prefetch = 0 : i64, scratch_operands = 0 : i64, tpu.core_type = #tpu.core_type<tc>, window_params = [{transform_indices = @transform_0, window_bounds = array<i64: 1, 128>}, {pipeline_mode = #tpu.pipeline_mode<synchronous>, transform_indices = @transform_1, window_bounds = array<i64: 32, 1>}, {pipeline_mode = #tpu.pipeline_mode<synchronous>, transform_indices = @transform_2, window_bounds = array<i64: 32, 1>}, {pipeline_mode = #tpu.pipeline_mode<synchronous>, transform_indices = @transform_3, window_bounds = array<i64: 3, 32, 32>}, {pipeline_mode = #tpu.pipeline_mode<synchronous>, transform_indices = @transform_4, window_bounds = array<i64: 3, 32, 1>}, {pipeline_mode = #tpu.pipeline_mode<synchronous>, transform_indices = @transform_5, window_bounds = array<i64: 8, 32>}, {pipeline_mode = #tpu.pipeline_mode<synchronous>, transform_indices = @transform_6, window_bounds = array<i64: 8, 1>}, {transform_indices = @transform_7, window_bounds = array<i64: 8, 128>}]} {
    %c0 = arith.constant 0 : index
    %c0_0 = arith.constant 0 : index
    %0 = vector.load %arg1[%c0, %c0_0] : memref<1x128xf32, #tpu.memory_space<vmem>>, vector<1x128xf32>
    %c0_1 = arith.constant 0 : index
    %c0_2 = arith.constant 0 : index
    %1 = vector.load %arg2[%c0_1, %c0_2] : memref<32x1xf32, #tpu.memory_space<vmem>>, vector<32x1xf32>
    %2 = vector.broadcast %1 : vector<32x1xf32> to vector<32x128xf32>
    %3 = vector.broadcast %0 : vector<1x128xf32> to vector<32x128xf32>
    %4 = arith.mulf %2, %3 : vector<32x128xf32>
    %c0_3 = arith.constant 0 : index
    %c0_4 = arith.constant 0 : index
    %5 = vector.load %arg3[%c0_3, %c0_4] : memref<32x1xf32, #tpu.memory_space<vmem>>, vector<32x1xf32>
    %6 = vector.broadcast %5 : vector<32x1xf32> to vector<32x128xf32>
    %7 = arith.addf %4, %6 : vector<32x128xf32>
    %8 = math.tanh %7 : vector<32x128xf32>
    %c0_5 = arith.constant 0 : index
    %c0_6 = arith.constant 0 : index
    %c0_7 = arith.constant 0 : index
    %9 = vector.load %arg4[%c0_5, %c0_6, %c0_7] : memref<3x32x32xbf16, #tpu.memory_space<vmem>>, vector<1x32x32xbf16>
    %10 = vector.shape_cast %9 : vector<1x32x32xbf16> to vector<32x32xbf16>
    %11 = arith.truncf %8 : vector<32x128xf32> to vector<32x128xbf16>
    %cst = arith.constant dense<0.000000e+00> : vector<32x128xf32>
    %12 = tpu.matmul %10, %11, %cst {dimension_numbers = #tpu.dot_dimension_numbers<[1], [0], [0], [1], [0, 0, 1, 1], [], []>} : vector<32x32xbf16>, vector<32x128xbf16>, vector<32x128xf32> -> vector<32x128xf32>
    %c0_8 = arith.constant 0 : index
    %c0_9 = arith.constant 0 : index
    %c0_10 = arith.constant 0 : index
    %13 = vector.load %arg5[%c0_8, %c0_9, %c0_10] : memref<3x32x1xf32, #tpu.memory_space<vmem>>, vector<1x32x1xf32>
    %14 = vector.shape_cast %13 : vector<1x32x1xf32> to vector<32x1xf32>
    %15 = vector.broadcast %14 : vector<32x1xf32> to vector<32x128xf32>
    %16 = arith.addf %12, %15 : vector<32x128xf32>
    %17 = math.tanh %16 : vector<32x128xf32>
    %c1 = arith.constant 1 : index
    %c0_11 = arith.constant 0 : index
    %c0_12 = arith.constant 0 : index
    %18 = vector.load %arg4[%c1, %c0_11, %c0_12] : memref<3x32x32xbf16, #tpu.memory_space<vmem>>, vector<1x32x32xbf16>
    %19 = vector.shape_cast %18 : vector<1x32x32xbf16> to vector<32x32xbf16>
    %20 = arith.truncf %17 : vector<32x128xf32> to vector<32x128xbf16>
    %cst_13 = arith.constant dense<0.000000e+00> : vector<32x128xf32>
    %21 = tpu.matmul %19, %20, %cst_13 {dimension_numbers = #tpu.dot_dimension_numbers<[1], [0], [0], [1], [0, 0, 1, 1], [], []>} : vector<32x32xbf16>, vector<32x128xbf16>, vector<32x128xf32> -> vector<32x128xf32>
    %c1_14 = arith.constant 1 : index
    %c0_15 = arith.constant 0 : index
    %c0_16 = arith.constant 0 : index
    %22 = vector.load %arg5[%c1_14, %c0_15, %c0_16] : memref<3x32x1xf32, #tpu.memory_space<vmem>>, vector<1x32x1xf32>
    %23 = vector.shape_cast %22 : vector<1x32x1xf32> to vector<32x1xf32>
    %24 = vector.broadcast %23 : vector<32x1xf32> to vector<32x128xf32>
    %25 = arith.addf %21, %24 : vector<32x128xf32>
    %26 = math.tanh %25 : vector<32x128xf32>
    %c2 = arith.constant 2 : index
    %c0_17 = arith.constant 0 : index
    %c0_18 = arith.constant 0 : index
    %27 = vector.load %arg4[%c2, %c0_17, %c0_18] : memref<3x32x32xbf16, #tpu.memory_space<vmem>>, vector<1x32x32xbf16>
    %28 = vector.shape_cast %27 : vector<1x32x32xbf16> to vector<32x32xbf16>
    %29 = arith.truncf %26 : vector<32x128xf32> to vector<32x128xbf16>
    %cst_19 = arith.constant dense<0.000000e+00> : vector<32x128xf32>
    %30 = tpu.matmul %28, %29, %cst_19 {dimension_numbers = #tpu.dot_dimension_numbers<[1], [0], [0], [1], [0, 0, 1, 1], [], []>} : vector<32x32xbf16>, vector<32x128xbf16>, vector<32x128xf32> -> vector<32x128xf32>
    %c2_20 = arith.constant 2 : index
    %c0_21 = arith.constant 0 : index
    %c0_22 = arith.constant 0 : index
    %31 = vector.load %arg5[%c2_20, %c0_21, %c0_22] : memref<3x32x1xf32, #tpu.memory_space<vmem>>, vector<1x32x1xf32>
    %32 = vector.shape_cast %31 : vector<1x32x1xf32> to vector<32x1xf32>
    %33 = vector.broadcast %32 : vector<32x1xf32> to vector<32x128xf32>
    %34 = arith.addf %30, %33 : vector<32x128xf32>
    %35 = math.tanh %34 : vector<32x128xf32>
    %c0_23 = arith.constant 0 : index
    %c0_24 = arith.constant 0 : index
    %36 = vector.load %arg6[%c0_23, %c0_24] : memref<8x32xbf16, #tpu.memory_space<vmem>>, vector<8x32xbf16>
    %37 = arith.truncf %35 : vector<32x128xf32> to vector<32x128xbf16>
    %cst_25 = arith.constant dense<0.000000e+00> : vector<8x128xf32>
    %38 = tpu.matmul %36, %37, %cst_25 {dimension_numbers = #tpu.dot_dimension_numbers<[1], [0], [0], [1], [0, 0, 1, 1], [], []>} : vector<8x32xbf16>, vector<32x128xbf16>, vector<8x128xf32> -> vector<8x128xf32>
    %c0_26 = arith.constant 0 : index
    %c0_27 = arith.constant 0 : index
    %39 = vector.load %arg7[%c0_26, %c0_27] : memref<8x1xf32, #tpu.memory_space<vmem>>, vector<8x1xf32>
    %40 = vector.broadcast %39 : vector<8x1xf32> to vector<8x128xf32>
    %41 = arith.addf %38, %40 : vector<8x128xf32>
    %c0_28 = arith.constant 0 : index
    %c0_29 = arith.constant 0 : index
    %42 = vector.load %arg8[%c0_28, %c0_29] : memref<8x128xf32, #tpu.memory_space<vmem>>, vector<8x128xf32>
    tpu.vector_store %arg8[%c0_28, %c0_29], %41 {strides = array<i32>} : memref<8x128xf32, #tpu.memory_space<vmem>>, vector<8x128xf32>,
    return
  }
  func.func @transform_0(%arg0: i32) -> (i32, i32) {
    %c0_i32 = arith.constant 0 : i32
    %c0_i32_0 = arith.constant 0 : i32
    return %c0_i32, %arg0 : i32, i32
  }
  func.func @transform_1(%arg0: i32) -> (i32, i32) {
    %c0_i32 = arith.constant 0 : i32
    %c0_i32_0 = arith.constant 0 : i32
    %c0_i32_1 = arith.constant 0 : i32
    return %c0_i32, %c0_i32_0 : i32, i32
  }
  func.func @transform_2(%arg0: i32) -> (i32, i32) {
    %c0_i32 = arith.constant 0 : i32
    %c0_i32_0 = arith.constant 0 : i32
    %c0_i32_1 = arith.constant 0 : i32
    return %c0_i32, %c0_i32_0 : i32, i32
  }
  func.func @transform_3(%arg0: i32) -> (i32, i32, i32) {
    %c0_i32 = arith.constant 0 : i32
    %c0_i32_0 = arith.constant 0 : i32
    %c0_i32_1 = arith.constant 0 : i32
    %c0_i32_2 = arith.constant 0 : i32
    return %c0_i32, %c0_i32_0, %c0_i32_1 : i32, i32, i32
  }
  func.func @transform_4(%arg0: i32) -> (i32, i32, i32) {
    %c0_i32 = arith.constant 0 : i32
    %c0_i32_0 = arith.constant 0 : i32
    %c0_i32_1 = arith.constant 0 : i32
    %c0_i32_2 = arith.constant 0 : i32
    return %c0_i32, %c0_i32_0, %c0_i32_1 : i32, i32, i32
  }
  func.func @transform_5(%arg0: i32) -> (i32, i32) {
    %c0_i32 = arith.constant 0 : i32
    %c0_i32_0 = arith.constant 0 : i32
    %c0_i32_1 = arith.constant 0 : i32
    return %c0_i32, %c0_i32_0 : i32, i32
  }
  func.func @transform_6(%arg0: i32) -> (i32, i32) {
    %c0_i32 = arith.constant 0 : i32
    %c0_i32_0 = arith.constant 0 : i32
    %c0_i32_1 = arith.constant 0 : i32
    return %c0_i32, %c0_i32_0 : i32, i32
  }
  func.func @transform_7(%arg0: i32) -> (i32, i32) {
    %c0_i32 = arith.constant 0 : i32
    %c0_i32_0 = arith.constant 0 : i32
    return %c0_i32, %arg0 : i32, i32
  }
}

</mosaic_0001>

<llo_original>
// kernel: tpu_custom_call.1
$region0: #{tpu_custom_call.1}
  #allocation0 [shape = 'u32[]', space=smem, size = 0x4, offset = 0x4, fixed_abs, tag = 'smem constant byte address 0x4 - core index']
  #allocation1 [shape = 'u32[144,128]{1,0:T(1,128)}', space=vmem, size = 0x12000, scoped, tag = 'internal scratch']
  %s0 = inlined_call_operand.vmem [shape: f32[1,128], index: 0, kind: input, shape index: {}]
  %s1 = inlined_call_operand.vmem [shape: f32[32,1], index: 1, kind: input, shape index: {}]
  %s2 = inlined_call_operand.vmem [shape: f32[32,1], index: 2, kind: input, shape index: {}]
  %s3 = inlined_call_operand.vmem [shape: bf16[3,32,32], index: 3, kind: input, shape index: {}]
  %s4 = inlined_call_operand.vmem [shape: f32[3,32,1], index: 4, kind: input, shape index: {}]
  %s5 = inlined_call_operand.vmem [shape: bf16[8,32], index: 5, kind: input, shape index: {}]
  %s6 = inlined_call_operand.vmem [shape: f32[8,1], index: 6, kind: input, shape index: {}]
  %s7 = inlined_call_operand.hbm [shape: f32[8,128], index: 7, kind: output, shape index: {}]
  %s8 = sld [smem:[#allocation0]]
  $region38: #{tpu_custom_call.1} parent=0
    _
  %s10 = ssub.s32 1, %s8
  %s11 = scalar_select 0, %s10, %s8
  $region1: #{tpu_custom_call.1} parent=0
    #allocation2 [shape = 'u8[4096]{0}', space=vmem, size = 0x1000, scoped, tag = 'output window, operand 0, single buffered']
    #allocation3 [shape = 's32[1]{0}', space=sflag, size = 0x4, scoped, tag = 'scoped memory for tpu_custom_call.1']
    %12 = vsyncpa [#allocation3], 0
    // Predicated region
    $region2: #{tpu_custom_call.1} parent=1 // pred_check
      _
    $region3: #{tpu_custom_call.1} parent=1 // pred_check_branch
      %14 = sbr.rel (0) target = $region5
    $region4: #{tpu_custom_call.1} parent=1 // pred_region
      _
    $region5: #{tpu_custom_call.1} parent=1 // pred_fallthru
      _
    // Predicated region
    $region6: #{tpu_custom_call.1} parent=1 // pred_check
      _
    $region7: #{tpu_custom_call.1} parent=1 // pred_check_branch
      %16 = sbr.rel (0) target = $region9
    $region8: #{tpu_custom_call.1} parent=1 // pred_region
      _
    $region9: #{tpu_custom_call.1} parent=1 // pred_fallthru
      _
    // Predicated region
    $region10: #{tpu_custom_call.1} parent=1 // pred_check
      _
    $region11: #{tpu_custom_call.1} parent=1 // pred_check_branch
      %18 = sbr.rel (0) target = $region13
    $region12: #{tpu_custom_call.1} parent=1 // pred_region
      _
    $region13: #{tpu_custom_call.1} parent=1 // pred_fallthru
      _
    // Predicated region
    $region14: #{tpu_custom_call.1} parent=1 // pred_check
      _
    $region15: #{tpu_custom_call.1} parent=1 // pred_check_branch
      %20 = sbr.rel (0) target = $region17
    $region16: #{tpu_custom_call.1} parent=1 // pred_region
      _
    $region17: #{tpu_custom_call.1} parent=1 // pred_fallthru
      _
    // Predicated region
    $region18: #{tpu_custom_call.1} parent=1 // pred_check
      _
    $region19: #{tpu_custom_call.1} parent=1 // pred_check_branch
      %22 = sbr.rel (0) target = $region21
    $region20: #{tpu_custom_call.1} parent=1 // pred_region
      _
    $region21: #{tpu_custom_call.1} parent=1 // pred_fallthru
      _
    // Predicated region
    $region22: #{tpu_custom_call.1} parent=1 // pred_check
      _
    $region23: #{tpu_custom_call.1} parent=1 // pred_check_branch
      %24 = sbr.rel (0) target = $region25
    $region24: #{tpu_custom_call.1} parent=1 // pred_region
      _
    $region25: #{tpu_custom_call.1} parent=1 // pred_fallthru
      _
    // Predicated region
    $region26: #{tpu_custom_call.1} parent=1 // pred_check
      _
    $region27: #{tpu_custom_call.1} parent=1 // pred_check_branch
      %26 = sbr.rel (0) target = $region29
    $region28: #{tpu_custom_call.1} parent=1 // pred_region
      _
    $region29: #{tpu_custom_call.1} parent=1 // pred_fallthru
      _
    %v28 = vld [vmem:[%s0] sm:$0x1]
    %v29 = vld [vmem:[%s1] sm:$0xff]
    %v30 = vld [vmem:[%s1 + $0x8] sm:$0xff]
    %v31 = vld [vmem:[%s1 + $0x10] sm:$0xff]
    %v32 = vld [vmem:[%s1 + $0x18] sm:$0xff]
    %34 = vset.pattern.permute.xlu0 0
    %35 = vperm.xlu0 %34, %v29
    %v36 = vpop.permute.xlu0 %35
    %39 = vset.pattern.permute.xlu0 0
    %40 = vperm.xlu0 %39, %v30
    %v41 = vpop.permute.xlu0 %40
    %44 = vset.pattern.permute.xlu0 0
    %45 = vperm.xlu0 %44, %v31
    %v46 = vpop.permute.xlu0 %45
    %49 = vset.pattern.permute.xlu0 0
    %50 = vperm.xlu0 %49, %v32
    %v51 = vpop.permute.xlu0 %50
    %v54 = vlaneseq
    %v55 = vshrl.u32 %v54, 7
    %v56 = vsub.s32 0, %v55
    %v57 = vrot.slane %v28, %v56
    %v59 = vmul.f32 %v36, %v57
    %v60 = vmul.f32 %v41, %v57
    %v61 = vmul.f32 %v46, %v57
    %v62 = vmul.f32 %v51, %v57
    %v63 = vld [vmem:[%s2] sm:$0xff]
    %v64 = vld [vmem:[%s2 + $0x8] sm:$0xff]
    %v65 = vld [vmem:[%s2 + $0x10] sm:$0xff]
    %v66 = vld [vmem:[%s2 + $0x18] sm:$0xff]
    %68 = vset.pattern.permute.xlu0 0
    %69 = vperm.xlu0 %68, %v63
    %v70 = vpop.permute.xlu0 %69
    %73 = vset.pattern.permute.xlu0 0
    %74 = vperm.xlu0 %73, %v64
    %v75 = vpop.permute.xlu0 %74
    %78 = vset.pattern.permute.xlu0 0
    %79 = vperm.xlu0 %78, %v65
    %v80 = vpop.permute.xlu0 %79
    %83 = vset.pattern.permute.xlu0 0
    %84 = vperm.xlu0 %83, %v66
    %v85 = vpop.permute.xlu0 %84
    %v87 = vadd.f32 %v59, %v70
    %v88 = vadd.f32 %v60, %v75
    %v89 = vadd.f32 %v61, %v80
    %v90 = vadd.f32 %v62, %v85
    %v91 = vtanh.pop %v87
    %v92 = vtanh.pop %v88
    %v93 = vtanh.pop %v89
    %v94 = vtanh.pop %v90
    %v95 = vld [vmem:[%s3] sm:$0xf]
    %v96 = vld [vmem:[%s3 + $0x4] sm:$0xf]
    %v97 = vld [vmem:[%s3 + $0x8] sm:$0xf]
    %v98 = vld [vmem:[%s3 + $0xc] sm:$0xf]
    %v99 = vpack.c.bf16 %v92, %v91
    %v100 = vpack.c.bf16 %v94, %v93
    %v101 = vld [vmem:[%s4] sm:$0xff]
    %v102 = vld [vmem:[%s4 + $0x8] sm:$0xff]
    %v103 = vld [vmem:[%s4 + $0x10] sm:$0xff]
    %v104 = vld [vmem:[%s4 + $0x18] sm:$0xff]
    %106 = vset.pattern.permute.xlu0 0
    %107 = vperm.xlu0 %106, %v101
    %v108 = vpop.permute.xlu0 %107
    %111 = vset.pattern.permute.xlu0 0
    %112 = vperm.xlu0 %111, %v102
    %v113 = vpop.permute.xlu0 %112
    %116 = vset.pattern.permute.xlu0 0
    %117 = vperm.xlu0 %116, %v103
    %v118 = vpop.permute.xlu0 %117
    %121 = vset.pattern.permute.xlu0 0
    %122 = vperm.xlu0 %121, %v104
    %v123 = vpop.permute.xlu0 %122
    %v129 = vunpack.c.l.b16 %v95
    %v130 = vunpack.c.l.b16 %v96
    %v131 = vunpack.c.l.b16 %v97
    %v132 = vunpack.c.l.b16 %v98
    %v133 = vpack.c.b16 %v130, %v129
    %v134 = vpack.c.b16 %v132, %v131
    %vm135 = vcmask 261120
    %v137 = vsel %vm135, %v133, 0
    %v140 = vsel %vm135, %v134, 0
    %142 = vmatprep.subr.bf16.mxu0 0
    %143 = vmatpush1.bf16.msra.mxu0 0
    %144 = vmatprep.subr.bf16.mxu0 0
    %145 = vmatpush1.bf16.msra.mxu0 0
    %146 = vmatprep.subr.bf16.mxu0 0
    %147 = vmatpush1.bf16.msra.mxu0 0
    %148 = vmatprep.subr.bf16.mxu0 0
    %149 = vmatpush1.bf16.msra.mxu0 0
    %150 = vmatprep.subr.bf16.mxu0 0
    %151 = vmatpush1.bf16.msra.mxu0 0
    %152 = vmatprep.subr.bf16.mxu0 0
    %153 = vmatpush1.bf16.msra.mxu0 0
    %154 = vmatprep.subr.bf16.mxu0 0
    %155 = vmatpush1.bf16.msra.mxu0 %v100
    %156 = vmatprep.subr.bf16.mxu0 0
    %157 = vmatpush1.bf16.msra.mxu0 %v99
    %158 = vmatprep.subr.bf16.mxu0 0
    %159 = vmatpush2.bf16.msra.mxu0 0
    %160 = vmatprep.subr.bf16.mxu0 0
    %161 = vmatpush2.bf16.msra.mxu0 0
    %162 = vmatprep.subr.bf16.mxu0 0
    %163 = vmatpush2.bf16.msra.mxu0 0
    %164 = vmatprep.subr.bf16.mxu0 0
    %165 = vmatpush2.bf16.msra.mxu0 0
    %166 = vmatprep.subr.bf16.mxu0 0
    %167 = vmatpush2.bf16.msra.mxu0 0
    %168 = vmatprep.subr.bf16.mxu0 0
    %169 = vmatpush2.bf16.msra.mxu0 0
    %170 = vmatprep.subr.bf16.mxu0 0
    %171 = vmatpush2.bf16.msra.mxu0 0
    %172 = vmatprep.subr.bf16.mxu0 0
    %173 = vmatpush2.bf16.msra.mxu0 0
    %174 = vmatprep.mubr.bf16.mxu0 0
    %175 = vmatmul.mubr.bf16.gmra.mxu0 %v137
    %v176 = vpop.f32.mrf.mxu0
    %v177 = vadd.f32 %v108, %v176
    %v178 = vpop.f32.mrf.mxu0
    %v179 = vpop.f32.mrf.mxu0
    %v180 = vadd.f32 %v113, %v179
    %v181 = vpop.f32.mrf.mxu0
    %182 = vmatprep.mubr.bf16.mxu0 0
    %183 = vmatmul.mubr.bf16.gmra.mxu0 %v140
    %v184 = vpop.f32.mrf.mxu0
    %v185 = vadd.f32 %v118, %v184
    %v186 = vpop.f32.mrf.mxu0
    %v187 = vpop.f32.mrf.mxu0
    %v188 = vadd.f32 %v123, %v187
    %v189 = vpop.f32.mrf.mxu0
    %190 = vdwg.mxu0
    %v191 = vtanh.pop %v177
    %v192 = vtanh.pop %v180
    %v193 = vtanh.pop %v185
    %v194 = vtanh.pop %v188
    %s195 = scalar_lea.vmem %s3, 16
    %v196 = vld [vmem:[%s195] sm:$0xf]
    %v197 = vld [vmem:[%s195 + $0x4] sm:$0xf]
    %v198 = vld [vmem:[%s195 + $0x8] sm:$0xf]
    %v199 = vld [vmem:[%s195 + $0xc] sm:$0xf]
    %v200 = vpack.c.bf16 %v192, %v191
    %v201 = vpack.c.bf16 %v194, %v193
    %s202 = scalar_lea.vmem %s4, 32
    %v203 = vld [vmem:[%s202] sm:$0xff]
    %v204 = vld [vmem:[%s202 + $0x8] sm:$0xff]
    %v205 = vld [vmem:[%s202 + $0x10] sm:$0xff]
    %v206 = vld [vmem:[%s202 + $0x18] sm:$0xff]
    %208 = vset.pattern.permute.xlu0 0
    %209 = vperm.xlu0 %208, %v203
    %v210 = vpop.permute.xlu0 %209
    %213 = vset.pattern.permute.xlu0 0
    %214 = vperm.xlu0 %213, %v204
    %v215 = vpop.permute.xlu0 %214
    %218 = vset.pattern.permute.xlu0 0
    %219 = vperm.xlu0 %218, %v205
    %v220 = vpop.permute.xlu0 %219
    %223 = vset.pattern.permute.xlu0 0
    %224 = vperm.xlu0 %223, %v206
    %v225 = vpop.permute.xlu0 %224
    %v231 = vunpack.c.l.b16 %v196
    %v232 = vunpack.c.l.b16 %v197
    %v233 = vunpack.c.l.b16 %v198
    %v234 = vunpack.c.l.b16 %v199
    %v235 = vpack.c.b16 %v232, %v231
    %v236 = vpack.c.b16 %v234, %v233
    %v238 = vsel %vm135, %v235, 0
    %v241 = vsel %vm135, %v236, 0
    %243 = vmatprep.subr.bf16.mxu0 0
    %244 = vmatpush1.bf16.msra.mxu0 0
    %245 = vmatprep.subr.bf16.mxu0 0
    %246 = vmatpush1.bf16.msra.mxu0 0
    %247 = vmatprep.subr.bf16.mxu0 0
    %248 = vmatpush1.bf16.msra.mxu0 0
    %249 = vmatprep.subr.bf16.mxu0 0
    %250 = vmatpush1.bf16.msra.mxu0 0
    %251 = vmatprep.subr.bf16.mxu0 0
    %252 = vmatpush1.bf16.msra.mxu0 0
    %253 = vmatprep.subr.bf16.mxu0 0
    %254 = vmatpush1.bf16.msra.mxu0 0
    %255 = vmatprep.subr.bf16.mxu0 0
    %256 = vmatpush1.bf16.msra.mxu0 %v201
    %257 = vmatprep.subr.bf16.mxu0 0
    %258 = vmatpush1.bf16.msra.mxu0 %v200
    %259 = vmatprep.subr.bf16.mxu0 0
    %260 = vmatpush2.bf16.msra.mxu0 0
    %261 = vmatprep.subr.bf16.mxu0 0
    %262 = vmatpush2.bf16.msra.mxu0 0
    %263 = vmatprep.subr.bf16.mxu0 0
    %264 = vmatpush2.bf16.msra.mxu0 0
    %265 = vmatprep.subr.bf16.mxu0 0
    %266 = vmatpush2.bf16.msra.mxu0 0
    %267 = vmatprep.subr.bf16.mxu0 0
    %268 = vmatpush2.bf16.msra.mxu0 0
    %269 = vmatprep.subr.bf16.mxu0 0
    %270 = vmatpush2.bf16.msra.mxu0 0
    %271 = vmatprep.subr.bf16.mxu0 0
    %272 = vmatpush2.bf16.msra.mxu0 0
    %273 = vmatprep.subr.bf16.mxu0 0
    %274 = vmatpush2.bf16.msra.mxu0 0
    %275 = vmatprep.mubr.bf16.mxu0 0
    %276 = vmatmul.mubr.bf16.gmra.mxu0 %v238
    %v277 = vpop.f32.mrf.mxu0
    %v278 = vadd.f32 %v210, %v277
    %v279 = vpop.f32.mrf.mxu0
    %v280 = vpop.f32.mrf.mxu0
    %v281 = vadd.f32 %v215, %v280
    %v282 = vpop.f32.mrf.mxu0
    %283 = vmatprep.mubr.bf16.mxu0 0
    %284 = vmatmul.mubr.bf16.gmra.mxu0 %v241
    %v285 = vpop.f32.mrf.mxu0
    %v286 = vadd.f32 %v220, %v285
    %v287 = vpop.f32.mrf.mxu0
    %v288 = vpop.f32.mrf.mxu0
    %v289 = vadd.f32 %v225, %v288
    %v290 = vpop.f32.mrf.mxu0
    %291 = vdwg.mxu0
    %v292 = vtanh.pop %v278
    %v293 = vtanh.pop %v281
    %v294 = vtanh.pop %v286
    %v295 = vtanh.pop %v289
    %s296 = scalar_lea.vmem %s3, 32
    %v297 = vld [vmem:[%s296] sm:$0xf]
    %v298 = vld [vmem:[%s296 + $0x4] sm:$0xf]
    %v299 = vld [vmem:[%s296 + $0x8] sm:$0xf]
    %v300 = vld [vmem:[%s296 + $0xc] sm:$0xf]
    %v301 = vpack.c.bf16 %v293, %v292
    %v302 = vpack.c.bf16 %v295, %v294
    %s303 = scalar_lea.vmem %s4, 64
    %v304 = vld [vmem:[%s303] sm:$0xff]
    %v305 = vld [vmem:[%s303 + $0x8] sm:$0xff]
    %v306 = vld [vmem:[%s303 + $0x10] sm:$0xff]
    %v307 = vld [vmem:[%s303 + $0x18] sm:$0xff]
    %309 = vset.pattern.permute.xlu0 0
    %310 = vperm.xlu0 %309, %v304
    %v311 = vpop.permute.xlu0 %310
    %314 = vset.pattern.permute.xlu0 0
    %315 = vperm.xlu0 %314, %v305
    %v316 = vpop.permute.xlu0 %315
    %319 = vset.pattern.permute.xlu0 0
    %320 = vperm.xlu0 %319, %v306
    %v321 = vpop.permute.xlu0 %320
    %324 = vset.pattern.permute.xlu0 0
    %325 = vperm.xlu0 %324, %v307
    %v326 = vpop.permute.xlu0 %325
    %v332 = vunpack.c.l.b16 %v297
    %v333 = vunpack.c.l.b16 %v298
    %v334 = vunpack.c.l.b16 %v299
    %v335 = vunpack.c.l.b16 %v300
    %v336 = vpack.c.b16 %v333, %v332
    %v337 = vpack.c.b16 %v335, %v334
    %v339 = vsel %vm135, %v336, 0
    %v342 = vsel %vm135, %v337, 0
    %344 = vmatprep.subr.bf16.mxu0 0
    %345 = vmatpush1.bf16.msra.mxu0 0
    %346 = vmatprep.subr.bf16.mxu0 0
    %347 = vmatpush1.bf16.msra.mxu0 0
    %348 = vmatprep.subr.bf16.mxu0 0
    %349 = vmatpush1.bf16.msra.mxu0 0
    %350 = vmatprep.subr.bf16.mxu0 0
    %351 = vmatpush1.bf16.msra.mxu0 0
    %352 = vmatprep.subr.bf16.mxu0 0
    %353 = vmatpush1.bf16.msra.mxu0 0
    %354 = vmatprep.subr.bf16.mxu0 0
    %355 = vmatpush1.bf16.msra.mxu0 0
    %356 = vmatprep.subr.bf16.mxu0 0
    %357 = vmatpush1.bf16.msra.mxu0 %v302
    %358 = vmatprep.subr.bf16.mxu0 0
    %359 = vmatpush1.bf16.msra.mxu0 %v301
    %360 = vmatprep.subr.bf16.mxu0 0
    %361 = vmatpush2.bf16.msra.mxu0 0
    %362 = vmatprep.subr.bf16.mxu0 0
    %363 = vmatpush2.bf16.msra.mxu0 0
    %364 = vmatprep.subr.bf16.mxu0 0
    %365 = vmatpush2.bf16.msra.mxu0 0
    %366 = vmatprep.subr.bf16.mxu0 0
    %367 = vmatpush2.bf16.msra.mxu0 0
    %368 = vmatprep.subr.bf16.mxu0 0
    %369 = vmatpush2.bf16.msra.mxu0 0
    %370 = vmatprep.subr.bf16.mxu0 0
    %371 = vmatpush2.bf16.msra.mxu0 0
    %372 = vmatprep.subr.bf16.mxu0 0
    %373 = vmatpush2.bf16.msra.mxu0 0
    %374 = vmatprep.subr.bf16.mxu0 0
    %375 = vmatpush2.bf16.msra.mxu0 0
    %376 = vmatprep.mubr.bf16.mxu0 0
    %377 = vmatmul.mubr.bf16.gmra.mxu0 %v339
    %v378 = vpop.f32.mrf.mxu0
    %v379 = vadd.f32 %v311, %v378
    %v380 = vpop.f32.mrf.mxu0
    %v381 = vpop.f32.mrf.mxu0
    %v382 = vadd.f32 %v316, %v381
    %v383 = vpop.f32.mrf.mxu0
    %384 = vmatprep.mubr.bf16.mxu0 0
    %385 = vmatmul.mubr.bf16.gmra.mxu0 %v342
    %v386 = vpop.f32.mrf.mxu0
    %v387 = vadd.f32 %v321, %v386
    %v388 = vpop.f32.mrf.mxu0
    %v389 = vpop.f32.mrf.mxu0
    %v390 = vadd.f32 %v326, %v389
    %v391 = vpop.f32.mrf.mxu0
    %392 = vdwg.mxu0
    %v393 = vtanh.pop %v379
    %v394 = vtanh.pop %v382
    %v395 = vtanh.pop %v387
    %v396 = vtanh.pop %v390
    %v397 = vld [vmem:[%s5] sm:$0xf]
    %v398 = vpack.c.bf16 %v394, %v393
    %v399 = vpack.c.bf16 %v396, %v395
    %v400 = vld [vmem:[%s6] sm:$0xff]
    %402 = vset.pattern.permute.xlu0 0
    %403 = vperm.xlu0 %402, %v400
    %v404 = vpop.permute.xlu0 %403
    %v407 = vsel %vm135, %v397, 0
    %409 = vmatprep.subr.bf16.mxu0 0
    %410 = vmatpush1.bf16.msra.mxu0 0
    %411 = vmatprep.subr.bf16.mxu0 0
    %412 = vmatpush1.bf16.msra.mxu0 0
    %413 = vmatprep.subr.bf16.mxu0 0
    %414 = vmatpush1.bf16.msra.mxu0 0
    %415 = vmatprep.subr.bf16.mxu0 0
    %416 = vmatpush1.bf16.msra.mxu0 0
    %417 = vmatprep.subr.bf16.mxu0 0
    %418 = vmatpush1.bf16.msra.mxu0 0
    %419 = vmatprep.subr.bf16.mxu0 0
    %420 = vmatpush1.bf16.msra.mxu0 0
    %421 = vmatprep.subr.bf16.mxu0 0
    %422 = vmatpush1.bf16.msra.mxu0 %v399
    %423 = vmatprep.subr.bf16.mxu0 0
    %424 = vmatpush1.bf16.msra.mxu0 %v398
    %425 = vmatprep.subr.bf16.mxu0 0
    %426 = vmatpush2.bf16.msra.mxu0 0
    %427 = vmatprep.subr.bf16.mxu0 0
    %428 = vmatpush2.bf16.msra.mxu0 0
    %429 = vmatprep.subr.bf16.mxu0 0
    %430 = vmatpush2.bf16.msra.mxu0 0
    %431 = vmatprep.subr.bf16.mxu0 0
    %432 = vmatpush2.bf16.msra.mxu0 0
    %433 = vmatprep.subr.bf16.mxu0 0
    %434 = vmatpush2.bf16.msra.mxu0 0
    %435 = vmatprep.subr.bf16.mxu0 0
    %436 = vmatpush2.bf16.msra.mxu0 0
    %437 = vmatprep.subr.bf16.mxu0 0
    %438 = vmatpush2.bf16.msra.mxu0 0
    %439 = vmatprep.subr.bf16.mxu0 0
    %440 = vmatpush2.bf16.msra.mxu0 0
    %441 = vmatprep.mubr.bf16.mxu0 0
    %442 = vmatmul.mubr.bf16.gmra.mxu0 %v407
    %v443 = vpop.f32.mrf.mxu0
    %v444 = vadd.f32 %v404, %v443
    %v445 = vpop.f32.mrf.mxu0
    %v446 = vpop.f32.mrf.mxu0
    %v447 = vpop.f32.mrf.mxu0
    %448 = vdwg.mxu0
    %449 = vst [vmem:[#allocation2] sm:$0xff] %v444
    // Predicated region
    $region30: #{tpu_custom_call.1} parent=1 // pred_check
      _
    $region31: #{tpu_custom_call.1} parent=1 // pred_check_branch
      %451 = sbr.rel (0) target = $region33
    $region32: #{tpu_custom_call.1} parent=1 // pred_region
      %s453 = ssub.s32 128, 128
      %454 = vsyncadd [#allocation3], %s453
      %s456 = sshll.u32 [#allocation2], 4
      %s457 = int_to_ptr.vmem [resolvable:$true] %s456
      %459 = dma.vmem_to_hbm [thread:$0]  %s457, 128, %s7, [#allocation3]
    $region33: #{tpu_custom_call.1} parent=1 // pred_fallthru
      _
    // Predicated region
    $region34: #{tpu_custom_call.1} parent=1 // pred_check
      _
    $region35: #{tpu_custom_call.1} parent=1 // pred_check_branch
      %461 = sbr.rel (0) target = $region37
    $region36: #{tpu_custom_call.1} parent=1 // pred_region
      %462 = dma.done [#allocation3], 128
    $region37: #{tpu_custom_call.1} parent=1 // pred_fallthru
      _
    %463 = vsyncpa [#allocation3], 1

</llo_original>
